<compile_context>
chip_gen: v7x
topology: tpu7x:2x2x1
jax: 0.10.0
libtpu: 0.0.40
codegen_flags: <defaults>
</compile_context>

<pallas_src>
import jax
import jax.numpy as jnp
from jax.experimental import pallas as pl
from jax.experimental.pallas import tpu as pltpu


def _discriminator_kernel(x_ref, w1_ref, b1_ref, w2_ref, b2_ref, w3_ref, b3_ref, o_ref):
    """Fused MLP forward: (Linear -> LeakyReLU) x2 -> Linear -> Sigmoid."""
    # Weights arrive pre-cast to bf16; only the activation path is cast here.
    x = x_ref[...].astype(jnp.bfloat16)

    # Layer 1: Linear (bf16 MXU, f32 accumulate) + LeakyReLU(0.2) in f32.
    h1 = jnp.dot(x, w1_ref[...], preferred_element_type=jnp.float32) + b1_ref[...]
    h1 = jnp.where(h1 > 0, h1, 0.2 * h1)

    # Layer 2: Linear + LeakyReLU(0.2).
    h2 = jnp.dot(h1.astype(jnp.bfloat16), w2_ref[...],
                 preferred_element_type=jnp.float32) + b2_ref[...]
    h2 = jnp.where(h2 > 0, h2, 0.2 * h2)

    # Layer 3: Linear + exact sigmoid via a single EUP tanh:
    #   sigmoid(x) = 0.5 * (tanh(x / 2) + 1)
    h3 = jnp.dot(h2.astype(jnp.bfloat16), w3_ref[...],
                 preferred_element_type=jnp.float32) + b3_ref[...]
    o_ref[...] = (0.5 * (jnp.tanh(0.5 * h3) + 1.0)).astype(o_ref.dtype)


def _cdiv(a, b):
    return -(-a // b)


def _round_up(a, b):
    return _cdiv(a, b) * b


def _choose_tiling(batch, *, target_tile=512, min_tiles=4):
    """Pick (tile_b, n_tiles): tiles <=~512 rows, >=4 grid steps when possible.

    >=4 steps keeps both v7x TensorCores fed with >=2 steps each (pipelining
    within a core); on single-TC v5e/v6e the ~512-row tiles keep per-step
    overhead amortized and DMA near the HBM roofline.
    """
    if batch <= 8:
        return 8, 1
    n_tiles = max(min_tiles, _cdiv(batch, target_tile))
    n_tiles = min(n_tiles, _cdiv(batch, 8))          # never below 8-row tiles
    tile_b = _round_up(_cdiv(batch, n_tiles), 8)
    n_tiles = _cdiv(batch, tile_b)
    return tile_b, n_tiles


def discriminator_forward(x, params, *, tile_b=None):
    """Run the fused Discriminator MLP as a single Pallas kernel.

    x: [B, input_dims] float32
    params: dict with w1 [Din,H], b1 [1,H], w2 [H,H], b2 [1,H], w3 [H,Dout], b3 [1,Dout]
    """
    B, Din = x.shape
    H = params["w1"].shape[1]
    Dout = params["w3"].shape[1]

    # Pre-cast weights to bf16 once (outside the kernel); biases stay f32.
    w1 = params["w1"].astype(jnp.bfloat16)
    w2 = params["w2"].astype(jnp.bfloat16)
    w3 = params["w3"].astype(jnp.bfloat16)
    b1 = params["b1"].astype(jnp.float32)
    b2 = params["b2"].astype(jnp.float32)
    b3 = params["b3"].astype(jnp.float32)

    # Lane-dense output: pad the last layer out to a multiple of 128 lanes so
    # the output store is an unmasked vst and the output DMA is dense.
    Dp = _round_up(Dout, 128)
    if Dp != Dout:
        w3 = jnp.pad(w3, ((0, 0), (0, Dp - Dout)))
        b3 = jnp.pad(b3, ((0, 0), (0, Dp - Dout)))

    # Batch tiling (balanced, padded with zero rows that get sliced off).
    if tile_b is None:
        tile_b, n_tiles = _choose_tiling(B)
    else:
        tile_b = max(8, _round_up(tile_b, 8))
        n_tiles = _cdiv(B, tile_b)
    Bp = n_tiles * tile_b
    xp = x if Bp == B else jnp.pad(x, ((0, Bp - B), (0, 0)))

    # x / out are tiled over the batch; weights & biases are broadcast
    # (constant index_map -> resident in VMEM across all grid steps).
    in_specs = [
        pl.BlockSpec((tile_b, Din), lambda i: (i, 0)),      # x
        pl.BlockSpec((Din, H), lambda i: (0, 0)),           # w1 (bf16)
        pl.BlockSpec((1, H), lambda i: (0, 0)),             # b1
        pl.BlockSpec((H, H), lambda i: (0, 0)),             # w2 (bf16)
        pl.BlockSpec((1, H), lambda i: (0, 0)),             # b2
        pl.BlockSpec((H, Dp), lambda i: (0, 0)),            # w3 (bf16, lane-padded)
        pl.BlockSpec((1, Dp), lambda i: (0, 0)),            # b3 (lane-padded)
    ]
    out_specs = pl.BlockSpec((tile_b, Dp), lambda i: (i, 0))

    out = pl.pallas_call(
        _discriminator_kernel,
        out_shape=jax.ShapeDtypeStruct((Bp, Dp), jnp.float32),
        grid=(n_tiles,),
        in_specs=in_specs,
        out_specs=out_specs,
        compiler_params=pltpu.CompilerParams(
            dimension_semantics=("parallel",),           # megacore-shard the batch axis
            vmem_limit_bytes=32 * 1024 * 1024,            # safe on v5e/v6e/v7x
        ),
    )(xp, w1, b1, w2, b2, w3, b3)

    return out[:B, :Dout]


def init_discriminator_params(key, input_dims, hidden_dims, output_dims):
    """Deterministic init mirroring nn.Linear default (uniform +/- 1/sqrt(fan_in))."""
    ks = jax.random.split(key, 6)

    def linear(kw, kb, fan_in, fan_out):
        bound = 1.0 / jnp.sqrt(jnp.float32(fan_in))
        w = jax.random.uniform(kw, (fan_in, fan_out), jnp.float32, -bound, bound)
        b = jax.random.uniform(kb, (1, fan_out), jnp.float32, -bound, bound)
        return w, b

    w1, b1 = linear(ks[0], ks[1], input_dims, hidden_dims)
    w2, b2 = linear(ks[2], ks[3], hidden_dims, hidden_dims)
    w3, b3 = linear(ks[4], ks[5], hidden_dims, output_dims)
    return {"w1": w1, "b1": b1, "w2": w2, "b2": b2, "w3": w3, "b3": b3}


def _reference_forward_f32(x, p):
    """Pure-f32 JAX reference (eval-mode dropout = identity)."""
    h = x @ p["w1"] + p["b1"]
    h = jnp.where(h > 0, h, 0.2 * h)
    h = h @ p["w2"] + p["b2"]
    h = jnp.where(h > 0, h, 0.2 * h)
    h = h @ p["w3"] + p["b3"]
    return jax.nn.sigmoid(h)


def _reference_forward_bf16(x, p):
    """Reference mirroring the kernel's bf16-matmul / f32-accumulate scheme."""
    bf = jnp.bfloat16

    def mm(a, w):
        return jnp.dot(a.astype(bf), w.astype(bf), preferred_element_type=jnp.float32)

    h = mm(x, p["w1"]) + p["b1"]
    h = jnp.where(h > 0, h, 0.2 * h)
    h = mm(h, p["w2"]) + p["b2"]
    h = jnp.where(h > 0, h, 0.2 * h)
    h = mm(h, p["w3"]) + p["b3"]
    return jax.nn.sigmoid(h)


if __name__ == "__main__":
    input_dims, hidden_dims, output_dims = 64, 32, 2
    batch = 512  # -> grid=(4,): >=2 steps per v7x TC, pipelined on v5e/v6e

    key = jax.random.PRNGKey(0)
    kx, kp = jax.random.split(key)
    x = jax.random.normal(kx, (batch, input_dims), dtype=jnp.float32)
    params = init_discriminator_params(kp, input_dims, hidden_dims, output_dims)

    out = discriminator_forward(x, params)
    out = jax.block_until_ready(out)
    assert out.shape == (batch, output_dims), out.shape

    # Main check: against a reference using the same bf16-matmul scheme
    # (kernel uses the exact tanh form of sigmoid, so this is tight).
    ref_bf16 = _reference_forward_bf16(x, params)
    assert jnp.allclose(out, ref_bf16, atol=2e-3, rtol=2e-3), "mismatch vs bf16 reference"

    # Sanity check: close to the pure-f32 math (loose tolerance due to bf16 MXU inputs).
    ref_f32 = _reference_forward_f32(x, params)
    assert jnp.allclose(out, ref_f32, atol=5e-2, rtol=5e-2), "mismatch vs f32 reference"

    # Exercise the non-divisible-batch (balanced tiles + pad) path.
    x_odd = x[:300]
    out_odd = jax.block_until_ready(discriminator_forward(x_odd, params))
    assert out_odd.shape == (300, output_dims), out_odd.shape
    assert jnp.allclose(out_odd, ref_bf16[:300], atol=2e-3, rtol=2e-3), "mismatch (padded batch)"

    print("KERNEL_OK")
</pallas_src>

<mosaic_0001>
module attributes {stable_mosaic.version = 11 : i64} {
  func.func @_discriminator_kernel(%arg0: i32, %arg1: memref<128x64xf32, #tpu.memory_space<vmem>>, %arg2: memref<64x32xbf16, #tpu.memory_space<vmem>>, %arg3: memref<1x32xf32, #tpu.memory_space<vmem>>, %arg4: memref<32x32xbf16, #tpu.memory_space<vmem>>, %arg5: memref<1x32xf32, #tpu.memory_space<vmem>>, %arg6: memref<32x128xbf16, #tpu.memory_space<vmem>>, %arg7: memref<1x128xf32, #tpu.memory_space<vmem>>, %arg8: memref<128x128xf32, #tpu.memory_space<vmem>>) attributes {dimension_semantics = [#tpu.dimension_semantics<parallel>], iteration_bounds = array<i64: 4>, scalar_prefetch = 0 : i64, scratch_operands = 0 : i64, tpu.core_type = #tpu.core_type<tc>, window_params = [{transform_indices = @transform_0, window_bounds = array<i64: 128, 64>}, {pipeline_mode = #tpu.pipeline_mode<synchronous>, transform_indices = @transform_1, window_bounds = array<i64: 64, 32>}, {pipeline_mode = #tpu.pipeline_mode<synchronous>, transform_indices = @transform_2, window_bounds = array<i64: 1, 32>}, {pipeline_mode = #tpu.pipeline_mode<synchronous>, transform_indices = @transform_3, window_bounds = array<i64: 32, 32>}, {pipeline_mode = #tpu.pipeline_mode<synchronous>, transform_indices = @transform_4, window_bounds = array<i64: 1, 32>}, {pipeline_mode = #tpu.pipeline_mode<synchronous>, transform_indices = @transform_5, window_bounds = array<i64: 32, 128>}, {pipeline_mode = #tpu.pipeline_mode<synchronous>, transform_indices = @transform_6, window_bounds = array<i64: 1, 128>}, {transform_indices = @transform_7, window_bounds = array<i64: 128, 128>}]} {
    %c0 = arith.constant 0 : index
    %c0_0 = arith.constant 0 : index
    %0 = vector.load %arg1[%c0, %c0_0] : memref<128x64xf32, #tpu.memory_space<vmem>>, vector<128x64xf32>
    %1 = arith.truncf %0 : vector<128x64xf32> to vector<128x64xbf16>
    %c0_1 = arith.constant 0 : index
    %c0_2 = arith.constant 0 : index
    %2 = vector.load %arg2[%c0_1, %c0_2] : memref<64x32xbf16, #tpu.memory_space<vmem>>, vector<64x32xbf16>
    %cst = arith.constant dense<0.000000e+00> : vector<128x32xf32>
    %3 = tpu.matmul %1, %2, %cst {dimension_numbers = #tpu.dot_dimension_numbers<[1], [0], [0], [1], [0, 0, 1, 1], [], []>} : vector<128x64xbf16>, vector<64x32xbf16>, vector<128x32xf32> -> vector<128x32xf32>
    %c0_3 = arith.constant 0 : index
    %c0_4 = arith.constant 0 : index
    %4 = vector.load %arg3[%c0_3, %c0_4] : memref<1x32xf32, #tpu.memory_space<vmem>>, vector<1x32xf32>
    %5 = vector.broadcast %4 : vector<1x32xf32> to vector<128x32xf32>
    %6 = arith.addf %3, %5 : vector<128x32xf32>
    %cst_5 = arith.constant 0.000000e+00 : f32
    %7 = vector.broadcast %cst_5 : f32 to vector<128x32xf32>
    %8 = arith.cmpf ogt, %6, %7 : vector<128x32xf32>
    %cst_6 = arith.constant 2.000000e-01 : f32
    %9 = vector.broadcast %cst_6 : f32 to vector<128x32xf32>
    %10 = arith.mulf %9, %6 : vector<128x32xf32>
    %11 = arith.select %8, %6, %10 : vector<128x32xi1>, vector<128x32xf32>
    %12 = arith.truncf %11 : vector<128x32xf32> to vector<128x32xbf16>
    %c0_7 = arith.constant 0 : index
    %c0_8 = arith.constant 0 : index
    %13 = vector.load %arg4[%c0_7, %c0_8] : memref<32x32xbf16, #tpu.memory_space<vmem>>, vector<32x32xbf16>
    %cst_9 = arith.constant dense<0.000000e+00> : vector<128x32xf32>
    %14 = tpu.matmul %12, %13, %cst_9 {dimension_numbers = #tpu.dot_dimension_numbers<[1], [0], [0], [1], [0, 0, 1, 1], [], []>} : vector<128x32xbf16>, vector<32x32xbf16>, vector<128x32xf32> -> vector<128x32xf32>
    %c0_10 = arith.constant 0 : index
    %c0_11 = arith.constant 0 : index
    %15 = vector.load %arg5[%c0_10, %c0_11] : memref<1x32xf32, #tpu.memory_space<vmem>>, vector<1x32xf32>
    %16 = vector.broadcast %15 : vector<1x32xf32> to vector<128x32xf32>
    %17 = arith.addf %14, %16 : vector<128x32xf32>
    %cst_12 = arith.constant 0.000000e+00 : f32
    %18 = vector.broadcast %cst_12 : f32 to vector<128x32xf32>
    %19 = arith.cmpf ogt, %17, %18 : vector<128x32xf32>
    %cst_13 = arith.constant 2.000000e-01 : f32
    %20 = vector.broadcast %cst_13 : f32 to vector<128x32xf32>
    %21 = arith.mulf %20, %17 : vector<128x32xf32>
    %22 = arith.select %19, %17, %21 : vector<128x32xi1>, vector<128x32xf32>
    %23 = arith.truncf %22 : vector<128x32xf32> to vector<128x32xbf16>
    %c0_14 = arith.constant 0 : index
    %c0_15 = arith.constant 0 : index
    %24 = vector.load %arg6[%c0_14, %c0_15] : memref<32x128xbf16, #tpu.memory_space<vmem>>, vector<32x128xbf16>
    %cst_16 = arith.constant dense<0.000000e+00> : vector<128x128xf32>
    %25 = tpu.matmul %23, %24, %cst_16 {dimension_numbers = #tpu.dot_dimension_numbers<[1], [0], [0], [1], [0, 0, 1, 1], [], []>} : vector<128x32xbf16>, vector<32x128xbf16>, vector<128x128xf32> -> vector<128x128xf32>
    %c0_17 = arith.constant 0 : index
    %c0_18 = arith.constant 0 : index
    %26 = vector.load %arg7[%c0_17, %c0_18] : memref<1x128xf32, #tpu.memory_space<vmem>>, vector<1x128xf32>
    %27 = vector.broadcast %26 : vector<1x128xf32> to vector<128x128xf32>
    %28 = arith.addf %25, %27 : vector<128x128xf32>
    %cst_19 = arith.constant 5.000000e-01 : f32
    %29 = vector.broadcast %cst_19 : f32 to vector<128x128xf32>
    %30 = arith.mulf %29, %28 : vector<128x128xf32>
    %31 = math.tanh %30 : vector<128x128xf32>
    %cst_20 = arith.constant 1.000000e+00 : f32
    %32 = vector.broadcast %cst_20 : f32 to vector<128x128xf32>
    %33 = arith.addf %31, %32 : vector<128x128xf32>
    %cst_21 = arith.constant 5.000000e-01 : f32
    %34 = vector.broadcast %cst_21 : f32 to vector<128x128xf32>
    %35 = arith.mulf %34, %33 : vector<128x128xf32>
    %c0_22 = arith.constant 0 : index
    %c0_23 = arith.constant 0 : index
    %36 = vector.load %arg8[%c0_22, %c0_23] : memref<128x128xf32, #tpu.memory_space<vmem>>, vector<128x128xf32>
    tpu.vector_store %arg8[%c0_22, %c0_23], %35 {strides = array<i32>} : memref<128x128xf32, #tpu.memory_space<vmem>>, vector<128x128xf32>,
    return
  }
  func.func @transform_0(%arg0: i32) -> (i32, i32) {
    %c0_i32 = arith.constant 0 : i32
    %c0_i32_0 = arith.constant 0 : i32
    return %arg0, %c0_i32 : i32, i32
  }
  func.func @transform_1(%arg0: i32) -> (i32, i32) {
    %c0_i32 = arith.constant 0 : i32
    %c0_i32_0 = arith.constant 0 : i32
    %c0_i32_1 = arith.constant 0 : i32
    return %c0_i32, %c0_i32_0 : i32, i32
  }
  func.func @transform_2(%arg0: i32) -> (i32, i32) {
    %c0_i32 = arith.constant 0 : i32
    %c0_i32_0 = arith.constant 0 : i32
    %c0_i32_1 = arith.constant 0 : i32
    return %c0_i32, %c0_i32_0 : i32, i32
  }
  func.func @transform_3(%arg0: i32) -> (i32, i32) {
    %c0_i32 = arith.constant 0 : i32
    %c0_i32_0 = arith.constant 0 : i32
    %c0_i32_1 = arith.constant 0 : i32
    return %c0_i32, %c0_i32_0 : i32, i32
  }
  func.func @transform_4(%arg0: i32) -> (i32, i32) {
    %c0_i32 = arith.constant 0 : i32
    %c0_i32_0 = arith.constant 0 : i32
    %c0_i32_1 = arith.constant 0 : i32
    return %c0_i32, %c0_i32_0 : i32, i32
  }
  func.func @transform_5(%arg0: i32) -> (i32, i32) {
    %c0_i32 = arith.constant 0 : i32
    %c0_i32_0 = arith.constant 0 : i32
    %c0_i32_1 = arith.constant 0 : i32
    return %c0_i32, %c0_i32_0 : i32, i32
  }
  func.func @transform_6(%arg0: i32) -> (i32, i32) {
    %c0_i32 = arith.constant 0 : i32
    %c0_i32_0 = arith.constant 0 : i32
    %c0_i32_1 = arith.constant 0 : i32
    return %c0_i32, %c0_i32_0 : i32, i32
  }
  func.func @transform_7(%arg0: i32) -> (i32, i32) {
    %c0_i32 = arith.constant 0 : i32
    %c0_i32_0 = arith.constant 0 : i32
    return %arg0, %c0_i32 : i32, i32
  }
}

</mosaic_0001>

<llo_original>
// kernel: tpu_custom_call.1
$region0: #{tpu_custom_call.1}
  #allocation0 [shape = 'u32[]', space=smem, size = 0x4, offset = 0x4, fixed_abs, tag = 'smem constant byte address 0x4 - core index']
  #allocation1 [shape = 'u32[144,128]{1,0:T(1,128)}', space=vmem, size = 0x12000, scoped, tag = 'internal scratch']
  %s0 = inlined_call_operand.vmem [shape: f32[512,64], index: 0, kind: input, shape index: {}]
  %s1 = inlined_call_operand.vmem [shape: bf16[64,32], index: 1, kind: input, shape index: {}]
  %s2 = inlined_call_operand.vmem [shape: f32[1,32], index: 2, kind: input, shape index: {}]
  %s3 = inlined_call_operand.vmem [shape: bf16[32,32], index: 3, kind: input, shape index: {}]
  %s4 = inlined_call_operand.vmem [shape: f32[1,32], index: 4, kind: input, shape index: {}]
  %s5 = inlined_call_operand.vmem [shape: bf16[32,128], index: 5, kind: input, shape index: {}]
  %s6 = inlined_call_operand.vmem [shape: f32[1,128], index: 6, kind: input, shape index: {}]
  %s7 = inlined_call_operand.hbm [shape: f32[512,128], index: 7, kind: output, shape index: {}]
  %s8 = sld [smem:[#allocation0]]
  $region61: #{tpu_custom_call.1} parent=0
    _
  %s10 = ssub.s32 1, %s8
  %s11 = scalar_select 0, %s10, %s8
  $region1: #{tpu_custom_call.1} parent=0
    #allocation2 [shape = 'u8[131072]{0}', space=vmem, size = 0x20000, scoped, tag = 'output window, operand 0']
    #allocation3 [shape = 's32[2]{0}', space=sflag, size = 0x8, scoped, tag = 'scoped memory for tpu_custom_call.1']
    %12 = vsyncpa [#allocation3], 0
    %s13 = scalar_lea.sflag [#allocation3], 1
    %14 = vsyncpa %s13, 0
    loop: start=0, step=1, limit=6
    $region2: #{tpu_custom_call.1} parent=1 // loop_pre_header
      _
    $region3: #{tpu_custom_call.1} parent=1 // loop_header
      %s16 = sphi 0, %s20
      %p17 = scmp.ge.s32.totalorder %s16, 6
      %s26 = sphi 0, %s28
      %s29 = sphi 0, %s26
      %s30 = sphi 0, %s29
      %s46 = sphi 0, %s30
      %s50 = sphi 0, %s50
      %s52 = sphi 0, %s50
      %s53 = sphi 0, %s52
      %s67 = sphi 0, %s53
      %s71 = sphi 0, %s71
      %s73 = sphi 0, %s71
      %s74 = sphi 0, %s73
      %s88 = sphi 0, %s74
      %s92 = sphi 0, %s92
      %s94 = sphi 0, %s92
      %s95 = sphi 0, %s94
      %s109 = sphi 0, %s95
      %s113 = sphi 0, %s113
      %s115 = sphi 0, %s113
      %s116 = sphi 0, %s115
      %s130 = sphi 0, %s116
      %s134 = sphi 0, %s134
      %s136 = sphi 0, %s134
      %s137 = sphi 0, %s136
      %s151 = sphi 0, %s137
      %s155 = sphi 0, %s155
      %s157 = sphi 0, %s155
      %s158 = sphi 0, %s157
      %s172 = sphi 0, %s158
      %s178 = sphi 0, %s180
      %s181 = sphi 0, %s178
      %s182 = sphi 0, %s181
      %s198 = sphi 0, %s182
    $region4: #{tpu_custom_call.1} parent=1 // loop_header_branch
      %19 = sbr.rel (%p17) target = $region8
    $region5: #{tpu_custom_call.1} parent=1 // loop_body
      %s21 = ssub.s32 %s16, 1
      %s22 = ssub.s32 %s16, 2
      %s23 = sadd.s32 %s16, 1
      %s24 = ssub.s32 %s16, %s23
      %p25 = scmp.eq.s32.totalorder %s24, 0
      %s27 = sadd.s32 %s26, 1
      %s28 = scalar_select %p25, %s26, %s27
      %p31 = pneg %p25
      %p32 = scmp.eq.s32.totalorder %s16, 3
      %p33 = por %p31, %p32
      %p34 = scmp.ne.s32.totalorder %s26, %s29
      %p35 = scmp.eq.s32.totalorder %s16, 0
      %p36 = por %p34, %p35
      %p37 = scmp.ne.s32.totalorder %s26, %s29
      %p38 = scmp.eq.s32.totalorder %s21, 3
      %p39 = por %p37, %p38
      %p40 = scmp.ne.s32.totalorder %s29, %s30
      %p41 = scmp.eq.s32.totalorder %s21, 0
      %p42 = por %p40, %p41
      %p43 = scmp.ne.s32.totalorder %s29, %s30
      %p44 = scmp.eq.s32.totalorder %s22, 3
      %p45 = por %p43, %p44
      %p47 = scmp.ne.s32.totalorder %s30, %s46
      %p48 = scmp.eq.s32.totalorder %s22, 0
      %p49 = por %p47, %p48
      %s51 = sadd.s32 %s50, 1
      %p54 = scmp.eq.s32.totalorder %s16, 3
      %p55 = scmp.ne.s32.totalorder %s50, %s52
      %p56 = scmp.eq.s32.totalorder %s16, 0
      %p57 = por %p55, %p56
      %p58 = scmp.ne.s32.totalorder %s50, %s52
      %p59 = scmp.eq.s32.totalorder %s21, 3
      %p60 = por %p58, %p59
      %p61 = scmp.ne.s32.totalorder %s52, %s53
      %p62 = scmp.eq.s32.totalorder %s21, 0
      %p63 = por %p61, %p62
      %p64 = scmp.ne.s32.totalorder %s52, %s53
      %p65 = scmp.eq.s32.totalorder %s22, 3
      %p66 = por %p64, %p65
      %p68 = scmp.ne.s32.totalorder %s53, %s67
      %p69 = scmp.eq.s32.totalorder %s22, 0
      %p70 = por %p68, %p69
      %s72 = sadd.s32 %s71, 1
      %p75 = scmp.eq.s32.totalorder %s16, 3
      %p76 = scmp.ne.s32.totalorder %s71, %s73
      %p77 = scmp.eq.s32.totalorder %s16, 0
      %p78 = por %p76, %p77
      %p79 = scmp.ne.s32.totalorder %s71, %s73
      %p80 = scmp.eq.s32.totalorder %s21, 3
      %p81 = por %p79, %p80
      %p82 = scmp.ne.s32.totalorder %s73, %s74
      %p83 = scmp.eq.s32.totalorder %s21, 0
      %p84 = por %p82, %p83
      %p85 = scmp.ne.s32.totalorder %s73, %s74
      %p86 = scmp.eq.s32.totalorder %s22, 3
      %p87 = por %p85, %p86
      %p89 = scmp.ne.s32.totalorder %s74, %s88
      %p90 = scmp.eq.s32.totalorder %s22, 0
      %p91 = por %p89, %p90
      %s93 = sadd.s32 %s92, 1
      %p96 = scmp.eq.s32.totalorder %s16, 3
      %p97 = scmp.ne.s32.totalorder %s92, %s94
      %p98 = scmp.eq.s32.totalorder %s16, 0
      %p99 = por %p97, %p98
      %p100 = scmp.ne.s32.totalorder %s92, %s94
      %p101 = scmp.eq.s32.totalorder %s21, 3
      %p102 = por %p100, %p101
      %p103 = scmp.ne.s32.totalorder %s94, %s95
      %p104 = scmp.eq.s32.totalorder %s21, 0
      %p105 = por %p103, %p104
      %p106 = scmp.ne.s32.totalorder %s94, %s95
      %p107 = scmp.eq.s32.totalorder %s22, 3
      %p108 = por %p106, %p107
      %p110 = scmp.ne.s32.totalorder %s95, %s109
      %p111 = scmp.eq.s32.totalorder %s22, 0
      %p112 = por %p110, %p111
      %s114 = sadd.s32 %s113, 1
      %p117 = scmp.eq.s32.totalorder %s16, 3
      %p118 = scmp.ne.s32.totalorder %s113, %s115
      %p119 = scmp.eq.s32.totalorder %s16, 0
      %p120 = por %p118, %p119
      %p121 = scmp.ne.s32.totalorder %s113, %s115
      %p122 = scmp.eq.s32.totalorder %s21, 3
      %p123 = por %p121, %p122
      %p124 = scmp.ne.s32.totalorder %s115, %s116
      %p125 = scmp.eq.s32.totalorder %s21, 0
      %p126 = por %p124, %p125
      %p127 = scmp.ne.s32.totalorder %s115, %s116
      %p128 = scmp.eq.s32.totalorder %s22, 3
      %p129 = por %p127, %p128
      %p131 = scmp.ne.s32.totalorder %s116, %s130
      %p132 = scmp.eq.s32.totalorder %s22, 0
      %p133 = por %p131, %p132
      %s135 = sadd.s32 %s134, 1
      %p138 = scmp.eq.s32.totalorder %s16, 3
      %p139 = scmp.ne.s32.totalorder %s134, %s136
      %p140 = scmp.eq.s32.totalorder %s16, 0
      %p141 = por %p139, %p140
      %p142 = scmp.ne.s32.totalorder %s134, %s136
      %p143 = scmp.eq.s32.totalorder %s21, 3
      %p144 = por %p142, %p143
      %p145 = scmp.ne.s32.totalorder %s136, %s137
      %p146 = scmp.eq.s32.totalorder %s21, 0
      %p147 = por %p145, %p146
      %p148 = scmp.ne.s32.totalorder %s136, %s137
      %p149 = scmp.eq.s32.totalorder %s22, 3
      %p150 = por %p148, %p149
      %p152 = scmp.ne.s32.totalorder %s137, %s151
      %p153 = scmp.eq.s32.totalorder %s22, 0
      %p154 = por %p152, %p153
      %s156 = sadd.s32 %s155, 1
      %p159 = scmp.eq.s32.totalorder %s16, 3
      %p160 = scmp.ne.s32.totalorder %s155, %s157
      %p161 = scmp.eq.s32.totalorder %s16, 0
      %p162 = por %p160, %p161
      %p163 = scmp.ne.s32.totalorder %s155, %s157
      %p164 = scmp.eq.s32.totalorder %s21, 3
      %p165 = por %p163, %p164
      %p166 = scmp.ne.s32.totalorder %s157, %s158
      %p167 = scmp.eq.s32.totalorder %s21, 0
      %p168 = por %p166, %p167
      %p169 = scmp.ne.s32.totalorder %s157, %s158
      %p170 = scmp.eq.s32.totalorder %s22, 3
      %p171 = por %p169, %p170
      %p173 = scmp.ne.s32.totalorder %s158, %s172
      %p174 = scmp.eq.s32.totalorder %s22, 0
      %p175 = por %p173, %p174
      %s176 = ssub.s32 %s16, %s23
      %p177 = scmp.eq.s32.totalorder %s176, 0
      %s179 = sadd.s32 %s178, 1
      %s180 = scalar_select %p177, %s178, %s179
      %p183 = pneg %p177
      %p184 = scmp.eq.s32.totalorder %s16, 3
      %p185 = por %p183, %p184
      %p186 = scmp.ne.s32.totalorder %s178, %s181
      %p187 = scmp.eq.s32.totalorder %s16, 0
      %p188 = por %p186, %p187
      %p189 = scmp.ne.s32.totalorder %s178, %s181
      %p190 = scmp.eq.s32.totalorder %s21, 3
      %p191 = por %p189, %p190
      %p192 = scmp.ne.s32.totalorder %s181, %s182
      %p193 = scmp.eq.s32.totalorder %s21, 0
      %p194 = por %p192, %p193
      %p195 = scmp.ne.s32.totalorder %s181, %s182
      %p196 = scmp.eq.s32.totalorder %s22, 3
      %p197 = por %p195, %p196
      %p199 = scmp.ne.s32.totalorder %s182, %s198
      %p200 = scmp.eq.s32.totalorder %s22, 0
      %p201 = por %p199, %p200
      %p202 = scmp.le.s32.totalorder 1, %s16
      %p203 = scmp.lt.s32.totalorder %s16, 5
      %p204 = pnand %p202, %p203
      %p205 = pneg %p204
      // Predicated region
      $region9: #{tpu_custom_call.1} parent=5 // pred_check
        _
      $region10: #{tpu_custom_call.1} parent=5 // pred_check_branch
        %207 = sbr.rel (%p204) target = $region12
      $region11: #{tpu_custom_call.1} parent=5 // pred_region
        %s208 = ssub.s32 %s16, 1
        // Predicated region
        $region13: #{tpu_custom_call.1} parent=11 // pred_check
          %p209 = pneg %p63
        $region14: #{tpu_custom_call.1} parent=11 // pred_check_branch
          %211 = sbr.rel (%p209) target = $region16
        $region15: #{tpu_custom_call.1} parent=11 // pred_region
          _
        $region16: #{tpu_custom_call.1} parent=11 // pred_fallthru
          _
        // Predicated region
        $region17: #{tpu_custom_call.1} parent=11 // pred_check
          %p212 = pneg %p84
        $region18: #{tpu_custom_call.1} parent=11 // pred_check_branch
          %214 = sbr.rel (%p212) target = $region20
        $region19: #{tpu_custom_call.1} parent=11 // pred_region
          _
        $region20: #{tpu_custom_call.1} parent=11 // pred_fallthru
          _
        // Predicated region
        $region21: #{tpu_custom_call.1} parent=11 // pred_check
          %p215 = pneg %p105
        $region22: #{tpu_custom_call.1} parent=11 // pred_check_branch
          %217 = sbr.rel (%p215) target = $region24
        $region23: #{tpu_custom_call.1} parent=11 // pred_region
          _
        $region24: #{tpu_custom_call.1} parent=11 // pred_fallthru
          _
        // Predicated region
        $region25: #{tpu_custom_call.1} parent=11 // pred_check
          %p218 = pneg %p126
        $region26: #{tpu_custom_call.1} parent=11 // pred_check_branch
          %220 = sbr.rel (%p218) target = $region28
        $region27: #{tpu_custom_call.1} parent=11 // pred_region
          _
        $region28: #{tpu_custom_call.1} parent=11 // pred_fallthru
          _
        // Predicated region
        $region29: #{tpu_custom_call.1} parent=11 // pred_check
          %p221 = pneg %p147
        $region30: #{tpu_custom_call.1} parent=11 // pred_check_branch
          %223 = sbr.rel (%p221) target = $region32
        $region31: #{tpu_custom_call.1} parent=11 // pred_region
          _
        $region32: #{tpu_custom_call.1} parent=11 // pred_fallthru
          _
        // Predicated region
        $region33: #{tpu_custom_call.1} parent=11 // pred_check
          %p224 = pneg %p168
        $region34: #{tpu_custom_call.1} parent=11 // pred_check_branch
          %226 = sbr.rel (%p224) target = $region36
        $region35: #{tpu_custom_call.1} parent=11 // pred_region
          _
        $region36: #{tpu_custom_call.1} parent=11 // pred_fallthru
          _
      $region12: #{tpu_custom_call.1} parent=5 // pred_fallthru
        _
      %p227 = scmp.lt.s32.totalorder %s16, 4
      // Predicated region
      $region37: #{tpu_custom_call.1} parent=5 // pred_check
        %p228 = pneg %p227
      $region38: #{tpu_custom_call.1} parent=5 // pred_check_branch
        %230 = sbr.rel (%p228) target = $region40
      $region39: #{tpu_custom_call.1} parent=5 // pred_region
        // Predicated region
        $region41: #{tpu_custom_call.1} parent=39 // pred_check
          %p231 = pneg %p36
        $region42: #{tpu_custom_call.1} parent=39 // pred_check_branch
          %233 = sbr.rel (%p231) target = $region44
        $region43: #{tpu_custom_call.1} parent=39 // pred_region
          %s234 = smul.u32 16, %s16
          %p235 = scmp.lt.s32.totalorder %s234, 63
          %s236 = scalar_select %p235, %s234, 63
          %s237 = smul.addr %s236, 8
          %s238 = scalar_lea.vmem %s0, %s237
          %s239 = smul.u32 16, %s16
        $region44: #{tpu_custom_call.1} parent=39 // pred_fallthru
          _
      $region40: #{tpu_custom_call.1} parent=5 // pred_fallthru
        _
      %p240 = scmp.le.s32.totalorder 1, %s16
      %p241 = scmp.lt.s32.totalorder %s16, 5
      %p242 = pnand %p240, %p241
      %p243 = pneg %p242
      // Predicated region
      $region45: #{tpu_custom_call.1} parent=5 // pred_check
        _
      $region46: #{tpu_custom_call.1} parent=5 // pred_check_branch
        %245 = sbr.rel (%p242) target = $region48
      $region47: #{tpu_custom_call.1} parent=5 // pred_region
        %s246 = ssub.s32 %s16, 1
        %s247 = smul.u32 16, %s21
        %p248 = scmp.lt.s32.totalorder %s247, 63
        %s249 = scalar_select %p248, %s247, 63
        %s250 = smul.addr %s249, 8
        %s251 = scalar_lea.vmem %s0, %s250
        %p252 = pneg %p42
        %p253 = pneg %p39
        %p254 = pneg %p63
        %p255 = pneg %p60
        %p256 = pneg %p84
        %p257 = pneg %p81
        %p258 = pneg %p105
        %p259 = pneg %p102
        %p260 = pneg %p126
        %p261 = pneg %p123
        %p262 = pneg %p147
        %p263 = pneg %p144
        %p264 = pneg %p168
        %p265 = pneg %p165
        %p266 = pneg %p194
        %p267 = pneg %p191
        %s268 = sand.u32 %s181, 1
        %s269 = scalar_lea.sflag [#allocation3], %s268
        %s270 = sand.u32 %s181, 1
        %s271 = smul.addr %s270, 128
        %s272 = scalar_lea.vmem [#allocation2], %s271
        %s273 = smul.u32 16, %s21
        %p274 = scmp.lt.s32.totalorder %s273, 63
        %s275 = scalar_select %p274, %s273, 63
        %s276 = smul.addr %s275, 8
        %s277 = scalar_lea.vmem %s0, %s276
        %s278 = smul.u32 16, %s21
        %s279 = smul.u32 16, %s21
        %v281 = vld [vmem:[%s277] sm:$0xff]
        %v282 = vld [vmem:[%s277 + $0x8] sm:$0xff]
        %v283 = vld [vmem:[%s277 + $0x10] sm:$0xff]
        %v284 = vld [vmem:[%s277 + $0x18] sm:$0xff]
        %v285 = vld [vmem:[%s277 + $0x20] sm:$0xff]
        %v286 = vld [vmem:[%s277 + $0x28] sm:$0xff]
        %v287 = vld [vmem:[%s277 + $0x30] sm:$0xff]
        %v288 = vld [vmem:[%s277 + $0x38] sm:$0xff]
        %v289 = vld [vmem:[%s277 + $0x40] sm:$0xff]
        %v290 = vld [vmem:[%s277 + $0x48] sm:$0xff]
        %v291 = vld [vmem:[%s277 + $0x50] sm:$0xff]
        %v292 = vld [vmem:[%s277 + $0x58] sm:$0xff]
        %v293 = vld [vmem:[%s277 + $0x60] sm:$0xff]
        %v294 = vld [vmem:[%s277 + $0x68] sm:$0xff]
        %v295 = vld [vmem:[%s277 + $0x70] sm:$0xff]
        %v296 = vld [vmem:[%s277 + $0x78] sm:$0xff]
        %v297 = vpack.c.bf16 %v282, %v281
        %v298 = vpack.c.bf16 %v284, %v283
        %v299 = vpack.c.bf16 %v286, %v285
        %v300 = vpack.c.bf16 %v288, %v287
        %v301 = vpack.c.bf16 %v290, %v289
        %v302 = vpack.c.bf16 %v292, %v291
        %v303 = vpack.c.bf16 %v294, %v293
        %v304 = vpack.c.bf16 %v296, %v295
        %v305 = vld [vmem:[%s1] sm:$0xf]
        %v306 = vld [vmem:[%s1 + $0x4] sm:$0xf]
        %v307 = vld [vmem:[%s1 + $0x8] sm:$0xf]
        %v308 = vld [vmem:[%s1 + $0xc] sm:$0xf]
        %v309 = vld [vmem:[%s1 + $0x10] sm:$0xf]
        %v310 = vld [vmem:[%s1 + $0x14] sm:$0xf]
        %v311 = vld [vmem:[%s1 + $0x18] sm:$0xf]
        %v312 = vld [vmem:[%s1 + $0x1c] sm:$0xf]
        %v313 = vld [vmem:[%s2] sm:$0x1]
        %v315 = vlaneseq
        %v316 = vshrl.u32 %v315, 7
        %v317 = vsub.s32 0, %v316
        %v318 = vrot.slane %v313, %v317
        %v328 = vunpack.c.l.b16 %v305
        %v329 = vunpack.c.l.b16 %v306
        %v330 = vunpack.c.l.b16 %v307
        %v331 = vunpack.c.l.b16 %v308
        %v332 = vunpack.c.l.b16 %v309
        %v333 = vunpack.c.l.b16 %v310
        %v334 = vunpack.c.l.b16 %v311
        %v335 = vunpack.c.l.b16 %v312
        %v336 = vpack.c.b16 %v329, %v328
        %v337 = vpack.c.b16 %v331, %v330
        %v338 = vpack.c.b16 %v333, %v332
        %v339 = vpack.c.b16 %v335, %v334
        %vm344 = vcmask 523264
        %v346 = vsel %vm344, %v297, 0
        %v349 = vsel %vm344, %v298, 0
        %v352 = vsel %vm344, %v299, 0
        %v355 = vsel %vm344, %v300, 0
        %v358 = vsel %vm344, %v301, 0
        %v361 = vsel %vm344, %v302, 0
        %v364 = vsel %vm344, %v303, 0
        %v367 = vsel %vm344, %v304, 0
        %369 = vmatprep.subr.bf16.mxu0 0
        %370 = vmatpush1.bf16.msra.mxu0 %v336
        %371 = vmatprep.subr.bf16.mxu0 0
        %372 = vmatpush1.bf16.msra.mxu0 %v337
        %373 = vmatprep.subr.bf16.mxu0 0
        %374 = vmatpush1.bf16.msra.mxu0 %v338
        %375 = vmatprep.subr.bf16.mxu0 0
        %376 = vmatpush1.bf16.msra.mxu0 %v339
        %377 = vmatprep.subr.bf16.mxu0 0
        %378 = vmatpush1.bf16.msra.mxu0 0
        %379 = vmatprep.subr.bf16.mxu0 0
        %380 = vmatpush1.bf16.msra.mxu0 0
        %381 = vmatprep.subr.bf16.mxu0 0
        %382 = vmatpush1.bf16.msra.mxu0 0
        %383 = vmatprep.subr.bf16.mxu0 0
        %384 = vmatpush1.bf16.msra.mxu0 0
        %385 = vmatprep.subr.bf16.mxu0 0
        %386 = vmatpush1.bf16.msra.mxu0 0
        %387 = vmatprep.subr.bf16.mxu0 0
        %388 = vmatpush1.bf16.msra.mxu0 0
        %389 = vmatprep.subr.bf16.mxu0 0
        %390 = vmatpush1.bf16.msra.mxu0 0
        %391 = vmatprep.subr.bf16.mxu0 0
        %392 = vmatpush1.bf16.msra.mxu0 0
        %393 = vmatprep.subr.bf16.mxu0 0
        %394 = vmatpush1.bf16.msra.mxu0 0
        %395 = vmatprep.subr.bf16.mxu0 0
        %396 = vmatpush1.bf16.msra.mxu0 0
        %397 = vmatprep.subr.bf16.mxu0 0
        %398 = vmatpush1.bf16.msra.mxu0 0
        %399 = vmatprep.subr.bf16.mxu0 0
        %400 = vmatpush1.bf16.msra.mxu0 0
        %401 = vmatprep.mubr.bf16.mxu0 0
        %402 = vmatmul.mubr.bf16.gmra.mrb[0].mxu0 %v346
        %v403 = vpop.f32.mrb[0].mxu0
        %v404 = vadd.f32 %v318, %v403
        %v405 = vpop.f32.mrb[0].mxu0
        %v406 = vpop.f32.mrb[0].mxu0
        %v407 = vadd.f32 %v318, %v406
        %v408 = vpop.f32.mrb[0].mxu0
        %409 = vmatprep.mubr.bf16.mxu0 0
        %410 = vmatmul.mubr.bf16.gmra.mrb[0].mxu0 %v349
        %v411 = vpop.f32.mrb[0].mxu0
        %v412 = vadd.f32 %v318, %v411
        %v413 = vpop.f32.mrb[0].mxu0
        %v414 = vpop.f32.mrb[0].mxu0
        %v415 = vadd.f32 %v318, %v414
        %v416 = vpop.f32.mrb[0].mxu0
        %417 = vmatprep.mubr.bf16.mxu0 0
        %418 = vmatmul.mubr.bf16.gmra.mrb[0].mxu0 %v352
        %v419 = vpop.f32.mrb[0].mxu0
        %v420 = vadd.f32 %v318, %v419
        %v421 = vpop.f32.mrb[0].mxu0
        %v422 = vpop.f32.mrb[0].mxu0
        %v423 = vadd.f32 %v318, %v422
        %v424 = vpop.f32.mrb[0].mxu0
        %425 = vmatprep.mubr.bf16.mxu0 0
        %426 = vmatmul.mubr.bf16.gmra.mrb[0].mxu0 %v355
        %v427 = vpop.f32.mrb[0].mxu0
        %v428 = vadd.f32 %v318, %v427
        %v429 = vpop.f32.mrb[0].mxu0
        %v430 = vpop.f32.mrb[0].mxu0
        %v431 = vadd.f32 %v318, %v430
        %v432 = vpop.f32.mrb[0].mxu0
        %433 = vmatprep.mubr.bf16.mxu0 0
        %434 = vmatmul.mubr.bf16.gmra.mrb[0].mxu0 %v358
        %v435 = vpop.f32.mrb[0].mxu0
        %v436 = vadd.f32 %v318, %v435
        %v437 = vpop.f32.mrb[0].mxu0
        %v438 = vpop.f32.mrb[0].mxu0
        %v439 = vadd.f32 %v318, %v438
        %v440 = vpop.f32.mrb[0].mxu0
        %441 = vmatprep.mubr.bf16.mxu0 0
        %442 = vmatmul.mubr.bf16.gmra.mrb[0].mxu0 %v361
        %v443 = vpop.f32.mrb[0].mxu0
        %v444 = vadd.f32 %v318, %v443
        %v445 = vpop.f32.mrb[0].mxu0
        %v446 = vpop.f32.mrb[0].mxu0
        %v447 = vadd.f32 %v318, %v446
        %v448 = vpop.f32.mrb[0].mxu0
        %449 = vmatprep.mubr.bf16.mxu0 0
        %450 = vmatmul.mubr.bf16.gmra.mrb[0].mxu0 %v364
        %v451 = vpop.f32.mrb[0].mxu0
        %v452 = vadd.f32 %v318, %v451
        %v453 = vpop.f32.mrb[0].mxu0
        %v454 = vpop.f32.mrb[0].mxu0
        %v455 = vadd.f32 %v318, %v454
        %v456 = vpop.f32.mrb[0].mxu0
        %457 = vmatprep.mubr.bf16.mxu0 0
        %458 = vmatmul.mubr.bf16.gmra.mrb[0].mxu0 %v367
        %v459 = vpop.f32.mrb[0].mxu0
        %v460 = vadd.f32 %v318, %v459
        %v461 = vpop.f32.mrb[0].mxu0
        %v462 = vpop.f32.mrb[0].mxu0
        %v463 = vadd.f32 %v318, %v462
        %v464 = vpop.f32.mrb[0].mxu0
        %465 = vdwg.mxu0
        %vm466 = vcmp.gt.f32.partialorder %v404, 0.0
        %vm467 = vcmp.gt.f32.partialorder %v407, 0.0
        %vm468 = vcmp.gt.f32.partialorder %v412, 0.0
        %vm469 = vcmp.gt.f32.partialorder %v415, 0.0
        %vm470 = vcmp.gt.f32.partialorder %v420, 0.0
        %vm471 = vcmp.gt.f32.partialorder %v423, 0.0
        %vm472 = vcmp.gt.f32.partialorder %v428, 0.0
        %vm473 = vcmp.gt.f32.partialorder %v431, 0.0
        %vm474 = vcmp.gt.f32.partialorder %v436, 0.0
        %vm475 = vcmp.gt.f32.partialorder %v439, 0.0
        %vm476 = vcmp.gt.f32.partialorder %v444, 0.0
        %vm477 = vcmp.gt.f32.partialorder %v447, 0.0
        %vm478 = vcmp.gt.f32.partialorder %v452, 0.0
        %vm479 = vcmp.gt.f32.partialorder %v455, 0.0
        %vm480 = vcmp.gt.f32.partialorder %v460, 0.0
        %vm481 = vcmp.gt.f32.partialorder %v463, 0.0
        %v482 = vmul.f32 %v404, 0.2
        %v483 = vmul.f32 %v407, 0.2
        %v484 = vmul.f32 %v412, 0.2
        %v485 = vmul.f32 %v415, 0.2
        %v486 = vmul.f32 %v420, 0.2
        %v487 = vmul.f32 %v423, 0.2
        %v488 = vmul.f32 %v428, 0.2
        %v489 = vmul.f32 %v431, 0.2
        %v490 = vmul.f32 %v436, 0.2
        %v491 = vmul.f32 %v439, 0.2
        %v492 = vmul.f32 %v444, 0.2
        %v493 = vmul.f32 %v447, 0.2
        %v494 = vmul.f32 %v452, 0.2
        %v495 = vmul.f32 %v455, 0.2
        %v496 = vmul.f32 %v460, 0.2
        %v497 = vmul.f32 %v463, 0.2
        %v498 = vsel %vm466, %v404, %v482
        %v499 = vsel %vm467, %v407, %v483
        %v500 = vsel %vm468, %v412, %v484
        %v501 = vsel %vm469, %v415, %v485
        %v502 = vsel %vm470, %v420, %v486
        %v503 = vsel %vm471, %v423, %v487
        %v504 = vsel %vm472, %v428, %v488
        %v505 = vsel %vm473, %v431, %v489
        %v506 = vsel %vm474, %v436, %v490
        %v507 = vsel %vm475, %v439, %v491
        %v508 = vsel %vm476, %v444, %v492
        %v509 = vsel %vm477, %v447, %v493
        %v510 = vsel %vm478, %v452, %v494
        %v511 = vsel %vm479, %v455, %v495
        %v512 = vsel %vm480, %v460, %v496
        %v513 = vsel %vm481, %v463, %v497
        %v514 = vpack.c.bf16 %v499, %v498
        %v515 = vpack.c.bf16 %v501, %v500
        %v516 = vpack.c.bf16 %v503, %v502
        %v517 = vpack.c.bf16 %v505, %v504
        %v518 = vpack.c.bf16 %v507, %v506
        %v519 = vpack.c.bf16 %v509, %v508
        %v520 = vpack.c.bf16 %v511, %v510
        %v521 = vpack.c.bf16 %v513, %v512
        %v522 = vld [vmem:[%s3] sm:$0xf]
        %v523 = vld [vmem:[%s3 + $0x4] sm:$0xf]
        %v524 = vld [vmem:[%s3 + $0x8] sm:$0xf]
        %v525 = vld [vmem:[%s3 + $0xc] sm:$0xf]
        %v526 = vld [vmem:[%s4] sm:$0x1]
        %v528 = vlaneseq
        %v529 = vshrl.u32 %v528, 7
        %v530 = vsub.s32 0, %v529
        %v531 = vrot.slane %v526, %v530
        %v537 = vunpack.c.l.b16 %v522
        %v538 = vunpack.c.l.b16 %v523
        %v539 = vunpack.c.l.b16 %v524
        %v540 = vunpack.c.l.b16 %v525
        %v541 = vpack.c.b16 %v538, %v537
        %v542 = vpack.c.b16 %v540, %v539
        %vm545 = vcmask 261120
        %v547 = vsel %vm545, %v514, 0
        %v550 = vsel %vm545, %v515, 0
        %v553 = vsel %vm545, %v516, 0
        %v556 = vsel %vm545, %v517, 0
        %v559 = vsel %vm545, %v518, 0
        %v562 = vsel %vm545, %v519, 0
        %v565 = vsel %vm545, %v520, 0
        %v568 = vsel %vm545, %v521, 0
        %570 = vmatprep.subr.bf16.mxu0 0
        %571 = vmatpush1.bf16.msra.mxu0 %v541
        %572 = vmatprep.subr.bf16.mxu0 0
        %573 = vmatpush1.bf16.msra.mxu0 %v542
        %574 = vmatprep.subr.bf16.mxu0 0
        %575 = vmatpush1.bf16.msra.mxu0 0
        %576 = vmatprep.subr.bf16.mxu0 0
        %577 = vmatpush1.bf16.msra.mxu0 0
        %578 = vmatprep.subr.bf16.mxu0 0
        %579 = vmatpush1.bf16.msra.mxu0 0
        %580 = vmatprep.subr.bf16.mxu0 0
        %581 = vmatpush1.bf16.msra.mxu0 0
        %582 = vmatprep.subr.bf16.mxu0 0
        %583 = vmatpush1.bf16.msra.mxu0 0
        %584 = vmatprep.subr.bf16.mxu0 0
        %585 = vmatpush1.bf16.msra.mxu0 0
        %586 = vmatprep.subr.bf16.mxu0 0
        %587 = vmatpush1.bf16.msra.mxu0 0
        %588 = vmatprep.subr.bf16.mxu0 0
        %589 = vmatpush1.bf16.msra.mxu0 0
        %590 = vmatprep.subr.bf16.mxu0 0
        %591 = vmatpush1.bf16.msra.mxu0 0
        %592 = vmatprep.subr.bf16.mxu0 0
        %593 = vmatpush1.bf16.msra.mxu0 0
        %594 = vmatprep.subr.bf16.mxu0 0
        %595 = vmatpush1.bf16.msra.mxu0 0
        %596 = vmatprep.subr.bf16.mxu0 0
        %597 = vmatpush1.bf16.msra.mxu0 0
        %598 = vmatprep.subr.bf16.mxu0 0
        %599 = vmatpush1.bf16.msra.mxu0 0
        %600 = vmatprep.subr.bf16.mxu0 0
        %601 = vmatpush1.bf16.msra.mxu0 0
        %602 = vmatprep.mubr.bf16.mxu0 0
        %603 = vmatmul.mubr.bf16.gmra.mrb[0].mxu0 %v547
        %v604 = vpop.f32.mrb[0].mxu0
        %v605 = vadd.f32 %v531, %v604
        %v606 = vpop.f32.mrb[0].mxu0
        %v607 = vpop.f32.mrb[0].mxu0
        %v608 = vadd.f32 %v531, %v607
        %v609 = vpop.f32.mrb[0].mxu0
        %610 = vmatprep.mubr.bf16.mxu0 0
        %611 = vmatmul.mubr.bf16.gmra.mrb[0].mxu0 %v550
        %v612 = vpop.f32.mrb[0].mxu0
        %v613 = vadd.f32 %v531, %v612
        %v614 = vpop.f32.mrb[0].mxu0
        %v615 = vpop.f32.mrb[0].mxu0
        %v616 = vadd.f32 %v531, %v615
        %v617 = vpop.f32.mrb[0].mxu0
        %618 = vmatprep.mubr.bf16.mxu0 0
        %619 = vmatmul.mubr.bf16.gmra.mrb[0].mxu0 %v553
        %v620 = vpop.f32.mrb[0].mxu0
        %v621 = vadd.f32 %v531, %v620
        %v622 = vpop.f32.mrb[0].mxu0
        %v623 = vpop.f32.mrb[0].mxu0
        %v624 = vadd.f32 %v531, %v623
        %v625 = vpop.f32.mrb[0].mxu0
        %626 = vmatprep.mubr.bf16.mxu0 0
        %627 = vmatmul.mubr.bf16.gmra.mrb[0].mxu0 %v556
        %v628 = vpop.f32.mrb[0].mxu0
        %v629 = vadd.f32 %v531, %v628
        %v630 = vpop.f32.mrb[0].mxu0
        %v631 = vpop.f32.mrb[0].mxu0
        %v632 = vadd.f32 %v531, %v631
        %v633 = vpop.f32.mrb[0].mxu0
        %634 = vmatprep.mubr.bf16.mxu0 0
        %635 = vmatmul.mubr.bf16.gmra.mrb[0].mxu0 %v559
        %v636 = vpop.f32.mrb[0].mxu0
        %v637 = vadd.f32 %v531, %v636
        %v638 = vpop.f32.mrb[0].mxu0
        %v639 = vpop.f32.mrb[0].mxu0
        %v640 = vadd.f32 %v531, %v639
        %v641 = vpop.f32.mrb[0].mxu0
        %642 = vmatprep.mubr.bf16.mxu0 0
        %643 = vmatmul.mubr.bf16.gmra.mrb[0].mxu0 %v562
        %v644 = vpop.f32.mrb[0].mxu0
        %v645 = vadd.f32 %v531, %v644
        %v646 = vpop.f32.mrb[0].mxu0
        %v647 = vpop.f32.mrb[0].mxu0
        %v648 = vadd.f32 %v531, %v647
        %v649 = vpop.f32.mrb[0].mxu0
        %650 = vmatprep.mubr.bf16.mxu0 0
        %651 = vmatmul.mubr.bf16.gmra.mrb[0].mxu0 %v565
        %v652 = vpop.f32.mrb[0].mxu0
        %v653 = vadd.f32 %v531, %v652
        %v654 = vpop.f32.mrb[0].mxu0
        %v655 = vpop.f32.mrb[0].mxu0
        %v656 = vadd.f32 %v531, %v655
        %v657 = vpop.f32.mrb[0].mxu0
        %658 = vmatprep.mubr.bf16.mxu0 0
        %659 = vmatmul.mubr.bf16.gmra.mrb[0].mxu0 %v568
        %v660 = vpop.f32.mrb[0].mxu0
        %v661 = vadd.f32 %v531, %v660
        %v662 = vpop.f32.mrb[0].mxu0
        %v663 = vpop.f32.mrb[0].mxu0
        %v664 = vadd.f32 %v531, %v663
        %v665 = vpop.f32.mrb[0].mxu0
        %666 = vdwg.mxu0
        %vm667 = vcmp.gt.f32.partialorder %v605, 0.0
        %vm668 = vcmp.gt.f32.partialorder %v608, 0.0
        %vm669 = vcmp.gt.f32.partialorder %v613, 0.0
        %vm670 = vcmp.gt.f32.partialorder %v616, 0.0
        %vm671 = vcmp.gt.f32.partialorder %v621, 0.0
        %vm672 = vcmp.gt.f32.partialorder %v624, 0.0
        %vm673 = vcmp.gt.f32.partialorder %v629, 0.0
        %vm674 = vcmp.gt.f32.partialorder %v632, 0.0
        %vm675 = vcmp.gt.f32.partialorder %v637, 0.0
        %vm676 = vcmp.gt.f32.partialorder %v640, 0.0
        %vm677 = vcmp.gt.f32.partialorder %v645, 0.0
        %vm678 = vcmp.gt.f32.partialorder %v648, 0.0
        %vm679 = vcmp.gt.f32.partialorder %v653, 0.0
        %vm680 = vcmp.gt.f32.partialorder %v656, 0.0
        %vm681 = vcmp.gt.f32.partialorder %v661, 0.0
        %vm682 = vcmp.gt.f32.partialorder %v664, 0.0
        %v683 = vmul.f32 %v605, 0.2
        %v684 = vmul.f32 %v608, 0.2
        %v685 = vmul.f32 %v613, 0.2
        %v686 = vmul.f32 %v616, 0.2
        %v687 = vmul.f32 %v621, 0.2
        %v688 = vmul.f32 %v624, 0.2
        %v689 = vmul.f32 %v629, 0.2
        %v690 = vmul.f32 %v632, 0.2
        %v691 = vmul.f32 %v637, 0.2
        %v692 = vmul.f32 %v640, 0.2
        %v693 = vmul.f32 %v645, 0.2
        %v694 = vmul.f32 %v648, 0.2
        %v695 = vmul.f32 %v653, 0.2
        %v696 = vmul.f32 %v656, 0.2
        %v697 = vmul.f32 %v661, 0.2
        %v698 = vmul.f32 %v664, 0.2
        %v699 = vsel %vm667, %v605, %v683
        %v700 = vsel %vm668, %v608, %v684
        %v701 = vsel %vm669, %v613, %v685
        %v702 = vsel %vm670, %v616, %v686
        %v703 = vsel %vm671, %v621, %v687
        %v704 = vsel %vm672, %v624, %v688
        %v705 = vsel %vm673, %v629, %v689
        %v706 = vsel %vm674, %v632, %v690
        %v707 = vsel %vm675, %v637, %v691
        %v708 = vsel %vm676, %v640, %v692
        %v709 = vsel %vm677, %v645, %v693
        %v710 = vsel %vm678, %v648, %v694
        %v711 = vsel %vm679, %v653, %v695
        %v712 = vsel %vm680, %v656, %v696
        %v713 = vsel %vm681, %v661, %v697
        %v714 = vsel %vm682, %v664, %v698
        %v715 = vpack.c.bf16 %v700, %v699
        %v716 = vpack.c.bf16 %v702, %v701
        %v717 = vpack.c.bf16 %v704, %v703
        %v718 = vpack.c.bf16 %v706, %v705
        %v719 = vpack.c.bf16 %v708, %v707
        %v720 = vpack.c.bf16 %v710, %v709
        %v721 = vpack.c.bf16 %v712, %v711
        %v722 = vpack.c.bf16 %v714, %v713
        %v723 = vld [vmem:[%s5] sm:$0xf]
        %v724 = vld [vmem:[%s5 + $0x4] sm:$0xf]
        %v725 = vld [vmem:[%s5 + $0x8] sm:$0xf]
        %v726 = vld [vmem:[%s5 + $0xc] sm:$0xf]
        %v727 = vld [vmem:[%s6] sm:$0x1]
        %v729 = vlaneseq
        %v730 = vshrl.u32 %v729, 7
        %v731 = vsub.s32 0, %v730
        %v732 = vrot.slane %v727, %v731
        %v738 = vunpack.c.l.b16 %v723
        %v739 = vunpack.c.l.b16 %v724
        %v740 = vunpack.c.l.b16 %v725
        %v741 = vunpack.c.l.b16 %v726
        %v742 = vpack.c.b16 %v739, %v738
        %v743 = vpack.c.b16 %v741, %v740
        %v747 = vsel %vm545, %v715, 0
        %v750 = vsel %vm545, %v716, 0
        %v753 = vsel %vm545, %v717, 0
        %v756 = vsel %vm545, %v718, 0
        %v759 = vsel %vm545, %v719, 0
        %v762 = vsel %vm545, %v720, 0
        %v765 = vsel %vm545, %v721, 0
        %v768 = vsel %vm545, %v722, 0
        %770 = vmatprep.subr.bf16.mxu0 0
        %771 = vmatpush1.bf16.msra.mxu0 %v742
        %772 = vmatprep.subr.bf16.mxu0 0
        %773 = vmatpush1.bf16.msra.mxu0 %v743
        %774 = vmatprep.subr.bf16.mxu0 0
        %775 = vmatpush1.bf16.msra.mxu0 0
        %776 = vmatprep.subr.bf16.mxu0 0
        %777 = vmatpush1.bf16.msra.mxu0 0
        %778 = vmatprep.subr.bf16.mxu0 0
        %779 = vmatpush1.bf16.msra.mxu0 0
        %780 = vmatprep.subr.bf16.mxu0 0
        %781 = vmatpush1.bf16.msra.mxu0 0
        %782 = vmatprep.subr.bf16.mxu0 0
        %783 = vmatpush1.bf16.msra.mxu0 0
        %784 = vmatprep.subr.bf16.mxu0 0
        %785 = vmatpush1.bf16.msra.mxu0 0
        %786 = vmatprep.subr.bf16.mxu0 0
        %787 = vmatpush1.bf16.msra.mxu0 0
        %788 = vmatprep.subr.bf16.mxu0 0
        %789 = vmatpush1.bf16.msra.mxu0 0
        %790 = vmatprep.subr.bf16.mxu0 0
        %791 = vmatpush1.bf16.msra.mxu0 0
        %792 = vmatprep.subr.bf16.mxu0 0
        %793 = vmatpush1.bf16.msra.mxu0 0
        %794 = vmatprep.subr.bf16.mxu0 0
        %795 = vmatpush1.bf16.msra.mxu0 0
        %796 = vmatprep.subr.bf16.mxu0 0
        %797 = vmatpush1.bf16.msra.mxu0 0
        %798 = vmatprep.subr.bf16.mxu0 0
        %799 = vmatpush1.bf16.msra.mxu0 0
        %800 = vmatprep.subr.bf16.mxu0 0
        %801 = vmatpush1.bf16.msra.mxu0 0
        %802 = vmatprep.mubr.bf16.mxu0 0
        %803 = vmatmul.mubr.bf16.gmra.mrb[0].mxu0 %v747
        %v804 = vpop.f32.mrb[0].mxu0
        %v805 = vadd.f32 %v732, %v804
        %v806 = vpop.f32.mrb[0].mxu0
        %v807 = vpop.f32.mrb[0].mxu0
        %v808 = vadd.f32 %v732, %v807
        %v809 = vpop.f32.mrb[0].mxu0
        %810 = vmatprep.mubr.bf16.mxu0 0
        %811 = vmatmul.mubr.bf16.gmra.mrb[0].mxu0 %v750
        %v812 = vpop.f32.mrb[0].mxu0
        %v813 = vadd.f32 %v732, %v812
        %v814 = vpop.f32.mrb[0].mxu0
        %v815 = vpop.f32.mrb[0].mxu0
        %v816 = vadd.f32 %v732, %v815
        %v817 = vpop.f32.mrb[0].mxu0
        %818 = vmatprep.mubr.bf16.mxu0 0
        %819 = vmatmul.mubr.bf16.gmra.mrb[0].mxu0 %v753
        %v820 = vpop.f32.mrb[0].mxu0
        %v821 = vadd.f32 %v732, %v820
        %v822 = vpop.f32.mrb[0].mxu0
        %v823 = vpop.f32.mrb[0].mxu0
        %v824 = vadd.f32 %v732, %v823
        %v825 = vpop.f32.mrb[0].mxu0
        %826 = vmatprep.mubr.bf16.mxu0 0
        %827 = vmatmul.mubr.bf16.gmra.mrb[0].mxu0 %v756
        %v828 = vpop.f32.mrb[0].mxu0
        %v829 = vadd.f32 %v732, %v828
        %v830 = vpop.f32.mrb[0].mxu0
        %v831 = vpop.f32.mrb[0].mxu0
        %v832 = vadd.f32 %v732, %v831
        %v833 = vpop.f32.mrb[0].mxu0
        %834 = vmatprep.mubr.bf16.mxu0 0
        %835 = vmatmul.mubr.bf16.gmra.mrb[0].mxu0 %v759
        %v836 = vpop.f32.mrb[0].mxu0
        %v837 = vadd.f32 %v732, %v836
        %v838 = vpop.f32.mrb[0].mxu0
        %v839 = vpop.f32.mrb[0].mxu0
        %v840 = vadd.f32 %v732, %v839
        %v841 = vpop.f32.mrb[0].mxu0
        %842 = vmatprep.mubr.bf16.mxu0 0
        %843 = vmatmul.mubr.bf16.gmra.mrb[0].mxu0 %v762
        %v844 = vpop.f32.mrb[0].mxu0
        %v845 = vadd.f32 %v732, %v844
        %v846 = vpop.f32.mrb[0].mxu0
        %v847 = vpop.f32.mrb[0].mxu0
        %v848 = vadd.f32 %v732, %v847
        %v849 = vpop.f32.mrb[0].mxu0
        %850 = vmatprep.mubr.bf16.mxu0 0
        %851 = vmatmul.mubr.bf16.gmra.mrb[0].mxu0 %v765
        %v852 = vpop.f32.mrb[0].mxu0
        %v853 = vadd.f32 %v732, %v852
        %v854 = vpop.f32.mrb[0].mxu0
        %v855 = vpop.f32.mrb[0].mxu0
        %v856 = vadd.f32 %v732, %v855
        %v857 = vpop.f32.mrb[0].mxu0
        %858 = vmatprep.mubr.bf16.mxu0 0
        %859 = vmatmul.mubr.bf16.gmra.mrb[0].mxu0 %v768
        %v860 = vpop.f32.mrb[0].mxu0
        %v861 = vadd.f32 %v732, %v860
        %v862 = vpop.f32.mrb[0].mxu0
        %v863 = vpop.f32.mrb[0].mxu0
        %v864 = vadd.f32 %v732, %v863
        %v865 = vpop.f32.mrb[0].mxu0
        %866 = vdwg.mxu0
        %v867 = vmul.f32 %v805, 0.5
        %v868 = vmul.f32 %v808, 0.5
        %v869 = vmul.f32 %v813, 0.5
        %v870 = vmul.f32 %v816, 0.5
        %v871 = vmul.f32 %v821, 0.5
        %v872 = vmul.f32 %v824, 0.5
        %v873 = vmul.f32 %v829, 0.5
        %v874 = vmul.f32 %v832, 0.5
        %v875 = vmul.f32 %v837, 0.5
        %v876 = vmul.f32 %v840, 0.5
        %v877 = vmul.f32 %v845, 0.5
        %v878 = vmul.f32 %v848, 0.5
        %v879 = vmul.f32 %v853, 0.5
        %v880 = vmul.f32 %v856, 0.5
        %v881 = vmul.f32 %v861, 0.5
        %v882 = vmul.f32 %v864, 0.5
        %v883 = vtanh.pop %v867
        %v884 = vtanh.pop %v868
        %v885 = vtanh.pop %v869
        %v886 = vtanh.pop %v870
        %v887 = vtanh.pop %v871
        %v888 = vtanh.pop %v872
        %v889 = vtanh.pop %v873
        %v890 = vtanh.pop %v874
        %v891 = vtanh.pop %v875
        %v892 = vtanh.pop %v876
        %v893 = vtanh.pop %v877
        %v894 = vtanh.pop %v878
        %v895 = vtanh.pop %v879
        %v896 = vtanh.pop %v880
        %v897 = vtanh.pop %v881
        %v898 = vtanh.pop %v882
        %v899 = vadd.f32 %v883, 1.0
        %v900 = vadd.f32 %v884, 1.0
        %v901 = vadd.f32 %v885, 1.0
        %v902 = vadd.f32 %v886, 1.0
        %v903 = vadd.f32 %v887, 1.0
        %v904 = vadd.f32 %v888, 1.0
        %v905 = vadd.f32 %v889, 1.0
        %v906 = vadd.f32 %v890, 1.0
        %v907 = vadd.f32 %v891, 1.0
        %v908 = vadd.f32 %v892, 1.0
        %v909 = vadd.f32 %v893, 1.0
        %v910 = vadd.f32 %v894, 1.0
        %v911 = vadd.f32 %v895, 1.0
        %v912 = vadd.f32 %v896, 1.0
        %v913 = vadd.f32 %v897, 1.0
        %v914 = vadd.f32 %v898, 1.0
        %v915 = vmul.f32 %v899, 0.5
        %v916 = vmul.f32 %v900, 0.5
        %v917 = vmul.f32 %v901, 0.5
        %v918 = vmul.f32 %v902, 0.5
        %v919 = vmul.f32 %v903, 0.5
        %v920 = vmul.f32 %v904, 0.5
        %v921 = vmul.f32 %v905, 0.5
        %v922 = vmul.f32 %v906, 0.5
        %v923 = vmul.f32 %v907, 0.5
        %v924 = vmul.f32 %v908, 0.5
        %v925 = vmul.f32 %v909, 0.5
        %v926 = vmul.f32 %v910, 0.5
        %v927 = vmul.f32 %v911, 0.5
        %v928 = vmul.f32 %v912, 0.5
        %v929 = vmul.f32 %v913, 0.5
        %v930 = vmul.f32 %v914, 0.5
        %931 = vst [vmem:[%s272] sm:$0xff] %v915
        %932 = vst [vmem:[%s272 + $0x8] sm:$0xff] %v916
        %933 = vst [vmem:[%s272 + $0x10] sm:$0xff] %v917
        %934 = vst [vmem:[%s272 + $0x18] sm:$0xff] %v918
        %935 = vst [vmem:[%s272 + $0x20] sm:$0xff] %v919
        %936 = vst [vmem:[%s272 + $0x28] sm:$0xff] %v920
        %937 = vst [vmem:[%s272 + $0x30] sm:$0xff] %v921
        %938 = vst [vmem:[%s272 + $0x38] sm:$0xff] %v922
        %939 = vst [vmem:[%s272 + $0x40] sm:$0xff] %v923
        %940 = vst [vmem:[%s272 + $0x48] sm:$0xff] %v924
        %941 = vst [vmem:[%s272 + $0x50] sm:$0xff] %v925
        %942 = vst [vmem:[%s272 + $0x58] sm:$0xff] %v926
        %943 = vst [vmem:[%s272 + $0x60] sm:$0xff] %v927
        %944 = vst [vmem:[%s272 + $0x68] sm:$0xff] %v928
        %945 = vst [vmem:[%s272 + $0x70] sm:$0xff] %v929
        %946 = vst [vmem:[%s272 + $0x78] sm:$0xff] %v930
        %s947 = sand.u32 %s181, 1
        %s948 = scalar_lea.sflag [#allocation3], %s947
        %s949 = sand.u32 %s181, 1
        %s950 = smul.addr %s949, 128
        %s951 = scalar_lea.vmem [#allocation2], %s950
        // Predicated region
        $region49: #{tpu_custom_call.1} parent=47 // pred_check
          %p952 = pneg %p191
        $region50: #{tpu_custom_call.1} parent=47 // pred_check_branch
          %954 = sbr.rel (%p952) target = $region52
        $region51: #{tpu_custom_call.1} parent=47 // pred_region
          %s955 = smul.u32 16, %s21
          %s957 = ssub.s32 2048, 2048
          %958 = vsyncadd %s948, %s957
          %s959 = smul.addr %s955, 128
          %s960 = scalar_lea.hbm %s7, %s959
          %s961 = sshll.u32 %s951, 4
          %s962 = int_to_ptr.vmem [resolvable:$true] %s961
          %967 = dma.vmem_to_hbm [thread:$0]  %s962, 2048, %s960, %s948, 128, 128, 8
        $region52: #{tpu_custom_call.1} parent=47 // pred_fallthru
          _
      $region48: #{tpu_custom_call.1} parent=5 // pred_fallthru
        _
      %p968 = scmp.le.s32.totalorder 2, %s16
      // Predicated region
      $region53: #{tpu_custom_call.1} parent=5 // pred_check
        %p969 = pneg %p968
      $region54: #{tpu_custom_call.1} parent=5 // pred_check_branch
        %971 = sbr.rel (%p969) target = $region56
      $region55: #{tpu_custom_call.1} parent=5 // pred_region
        %s972 = ssub.s32 %s16, 2
        // Predicated region
        $region57: #{tpu_custom_call.1} parent=55 // pred_check
          %p973 = pneg %p197
        $region58: #{tpu_custom_call.1} parent=55 // pred_check_branch
          %975 = sbr.rel (%p973) target = $region60
        $region59: #{tpu_custom_call.1} parent=55 // pred_region
          %s976 = sand.u32 %s182, 1
          %s977 = scalar_lea.sflag [#allocation3], %s976
          %s978 = sand.u32 %s182, 1
          %s979 = smul.addr %s978, 128
          %s980 = scalar_lea.vmem [#allocation2], %s979
          %981 = dma.done %s977, 2048
        $region60: #{tpu_custom_call.1} parent=55 // pred_fallthru
          _
      $region56: #{tpu_custom_call.1} parent=5 // pred_fallthru
        _
    $region6: #{tpu_custom_call.1} parent=1 // loop_footer
      %s20 = sadd.s32 1, %s16
    $region7: #{tpu_custom_call.1} parent=1 // loop_footer_branch
      %15 = sbr.rel target = $region3
    $region8: #{tpu_custom_call.1} parent=1 // loop_exit
      _
    %982 = vsyncpa [#allocation3], 1
    %s983 = scalar_lea.sflag [#allocation3], 1
    %984 = vsyncpa %s983, 1

</llo_original>
